<compile_context>
chip_gen: v7x
topology: tpu7x:2x2x1
jax: 0.10.0
libtpu: 0.0.40
codegen_flags: <defaults>
</compile_context>

<pallas_src>
import jax
import jax.numpy as jnp
from jax.experimental import pallas as pl
from jax.experimental.pallas import tpu as pltpu


def _fr_wsbn_kernel(x_ref, se_ref, so_ref, k1_ref, k2_ref, scale_ref, shift_ref, o_ref):
    # x_ref:  (C_in, R, 2*Wp)   row-pair block of one image (even row | odd row per pair)
    # se/so:  (2*Wp, Wo)        0/1 column-selection matrices (even/even, odd/odd taps)
    # k1/k2:  (C*_half*R, C_in*R)  kron(conv_weight, I_R) block-diagonal conv weights (f32)
    # scale/shift: (C_out, 1, 1)   folded inference BatchNorm affine
    # o_ref:  (C_out, R, Wo)
    c_in, r_blk, w2 = x_ref.shape
    c1 = k1_ref.shape[0] // r_blk
    c2 = k2_ref.shape[0] // r_blk
    wo = se_ref.shape[1]

    # ReLU (VPU), then merge (channel, row-pair) into one big matmul M dimension.
    x = jnp.maximum(x_ref[...], 0.0).reshape(c_in * r_blk, w2)

    # Stride-2 spatial decimation of both conv paths as MXU matmuls (M = C_in*R).
    xe = jnp.dot(x, se_ref[...], preferred_element_type=jnp.float32)   # (C_in*R, Wo)
    xo = jnp.dot(x, so_ref[...], preferred_element_type=jnp.float32)   # (C_in*R, Wo)

    # 1x1 convolutions (channel contraction) as single block-diagonal MXU matmuls.
    y1 = jnp.dot(k1_ref[...], xe, preferred_element_type=jnp.float32)  # (C1*R, Wo)
    y2 = jnp.dot(k2_ref[...], xo, preferred_element_type=jnp.float32)  # (C2*R, Wo)
    y1 = y1.reshape(c1, r_blk, wo)
    y2 = y2.reshape(c2, r_blk, wo)

    scale = scale_ref[...]
    shift = shift_ref[...]
    # torch.cat along channels == write the two channel ranges; BN affine fused in.
    o_ref[:c1] = (y1 * scale[:c1] + shift[:c1]).astype(o_ref.dtype)
    o_ref[c1:] = (y2 * scale[c1:] + shift[c1:]).astype(o_ref.dtype)


def factorized_reduce_wsbn(x, w1, w2, running_mean, running_var, gamma, beta,
                           prev_id, eps=1e-5):
    """x: (N, C_in, H, W) NCHW.  w1: (C_out//2, C_in), w2: (C_out - C_out//2, C_in).
    running_mean/var, gamma, beta: (num_possible_inputs, C_out); prev_id: python int.
    Returns (N, C_out, ceil(H/2), ceil(W/2)) matching FactorizedReduceWSBN.forward."""
    N, C_in, H, W = x.shape
    C1, C2 = w1.shape[0], w2.shape[0]
    C_out = C1 + C2
    Ho, Wo = (H + 1) // 2, (W + 1) // 2
    Hp, Wp = 2 * Ho, 2 * Wo

    # Zero-pad H/W to even sizes; relu(0)=0 and the odd path's ConstantPad2d zeros are
    # exactly these padded cells, so semantics are preserved.
    if (Hp, Wp) != (H, W):
        x = jnp.pad(x, ((0, 0), (0, 0), (0, Hp - H), (0, Wp - W)))

    # Free (contiguity-preserving) reshape: each row holds (even row | odd row).
    x4 = x.reshape(N, C_in, Ho, 2 * Wp)

    # Row-pairs per grid step (block 2nd-to-last dim must be a multiple of 8 or the full dim).
    R = 8 if Ho % 8 == 0 else Ho
    n_row_blocks = Ho // R

    # 0/1 selection matrices: even path -> column 2j of the even row; odd path -> column
    # 2j+1 of the odd row (lives at offset Wp in the merged row-pair).
    w_idx = jnp.arange(2 * Wp)[:, None]
    j_idx = jnp.arange(Wo)[None, :]
    sel_even = (w_idx == 2 * j_idx).astype(x.dtype)                # (2*Wp, Wo)
    sel_odd = (w_idx == (Wp + 2 * j_idx + 1)).astype(x.dtype)      # (2*Wp, Wo)

    # Block-diagonal conv weights: kron(W, I_R)[o*R+r, c*R+r'] = W[o,c] * (r==r').
    eye_r = jnp.eye(R, dtype=jnp.float32)
    k1 = jnp.kron(w1.astype(jnp.float32), eye_r)                   # (C1*R, C_in*R)
    k2 = jnp.kron(w2.astype(jnp.float32), eye_r)                   # (C2*R, C_in*R)

    # Fold inference BatchNorm (selected prev_id) into per-channel scale/shift.
    mean = running_mean[prev_id].astype(jnp.float32)
    var = running_var[prev_id].astype(jnp.float32)
    g = gamma[prev_id].astype(jnp.float32)
    b = beta[prev_id].astype(jnp.float32)
    inv = jax.lax.rsqrt(var + eps)
    scale = (g * inv).reshape(C_out, 1, 1)
    shift = (b - mean * g * inv).reshape(C_out, 1, 1)

    out = pl.pallas_call(
        _fr_wsbn_kernel,
        out_shape=jax.ShapeDtypeStruct((N, C_out, Ho, Wo), x.dtype),
        grid_spec=pltpu.PrefetchScalarGridSpec(
            num_scalar_prefetch=0,
            grid=(N, n_row_blocks),
            in_specs=[
                pl.BlockSpec((None, C_in, R, 2 * Wp), lambda n, rb: (n, 0, rb, 0)),
                pl.BlockSpec((2 * Wp, Wo), lambda n, rb: (0, 0)),
                pl.BlockSpec((2 * Wp, Wo), lambda n, rb: (0, 0)),
                pl.BlockSpec((C1 * R, C_in * R), lambda n, rb: (0, 0)),
                pl.BlockSpec((C2 * R, C_in * R), lambda n, rb: (0, 0)),
                pl.BlockSpec((C_out, 1, 1), lambda n, rb: (0, 0, 0)),
                pl.BlockSpec((C_out, 1, 1), lambda n, rb: (0, 0, 0)),
            ],
            out_specs=pl.BlockSpec((None, C_out, R, Wo), lambda n, rb: (n, 0, rb, 0)),
        ),
        compiler_params=pltpu.CompilerParams(
            dimension_semantics=("parallel", "parallel"),
            vmem_limit_bytes=64 * 1024 * 1024,
        ),
    )(x4, sel_even, sel_odd, k1, k2, scale, shift)

    return out


def _reference(x, w1, w2, mean, var, gamma, beta, eps=1e-5):
    """Pure-JAX port of FactorizedReduceWSBN.forward (inference-path BatchNorm)."""
    xr = jnp.maximum(x, 0.0)
    xe = xr[:, :, ::2, ::2]                                        # conv1 path
    xp = jnp.pad(xr, ((0, 0), (0, 0), (0, 1), (0, 1)))[:, :, 1:, 1:]
    xo = xp[:, :, ::2, ::2]                                        # conv2 path
    y1 = jnp.einsum('oc,nchw->nohw', w1.astype(jnp.float32), xe.astype(jnp.float32))
    y2 = jnp.einsum('oc,nchw->nohw', w2.astype(jnp.float32), xo.astype(jnp.float32))
    y = jnp.concatenate([y1, y2], axis=1)
    inv = 1.0 / jnp.sqrt(var.astype(jnp.float32) + eps)
    sc = (gamma * inv)[None, :, None, None]
    sh = (beta - mean * gamma * inv)[None, :, None, None]
    return (y * sc + sh).astype(x.dtype)


if __name__ == "__main__":
    key = jax.random.PRNGKey(0)
    ks = jax.random.split(key, 7)

    N, C_in, H, W = 2, 4, 16, 16
    C_out = 8
    num_possible_inputs = 3
    prev_id = 1
    C1 = C_out // 2
    C2 = C_out - C1

    x = jax.random.normal(ks[0], (N, C_in, H, W), dtype=jnp.float32)
    w1 = 0.1 * jax.random.normal(ks[1], (C1, C_in), dtype=jnp.float32)
    w2 = 0.1 * jax.random.normal(ks[2], (C2, C_in), dtype=jnp.float32)
    running_mean = 0.1 * jax.random.normal(ks[3], (num_possible_inputs, C_out), dtype=jnp.float32)
    running_var = jax.random.uniform(ks[4], (num_possible_inputs, C_out),
                                     dtype=jnp.float32, minval=0.5, maxval=1.5)
    gamma = jax.random.uniform(ks[5], (num_possible_inputs, C_out),
                               dtype=jnp.float32, minval=0.5, maxval=1.5)
    beta = 0.1 * jax.random.normal(ks[6], (num_possible_inputs, C_out), dtype=jnp.float32)

    out = factorized_reduce_wsbn(x, w1, w2, running_mean, running_var, gamma, beta, prev_id)
    out = jax.block_until_ready(out)

    ref = _reference(x, w1, w2, running_mean[prev_id], running_var[prev_id],
                     gamma[prev_id], beta[prev_id])

    assert out.shape == (N, C_out, H // 2, W // 2), out.shape
    assert jnp.allclose(out, ref, atol=1e-4, rtol=1e-4), "mismatch vs reference"

    print("KERNEL_OK")
</pallas_src>

<mosaic_0001>
module attributes {stable_mosaic.version = 11 : i64} {
  func.func @_fr_wsbn_kernel(%arg0: i32, %arg1: i32, %arg2: memref<1x4x8x32xf32, #tpu.memory_space<vmem>>, %arg3: memref<32x8xf32, #tpu.memory_space<vmem>>, %arg4: memref<32x8xf32, #tpu.memory_space<vmem>>, %arg5: memref<32x32xf32, #tpu.memory_space<vmem>>, %arg6: memref<32x32xf32, #tpu.memory_space<vmem>>, %arg7: memref<8x1x1xf32, #tpu.memory_space<vmem>>, %arg8: memref<8x1x1xf32, #tpu.memory_space<vmem>>, %arg9: memref<1x8x8x8xf32, #tpu.memory_space<vmem>>) attributes {dimension_semantics = [#tpu.dimension_semantics<parallel>, #tpu.dimension_semantics<parallel>], iteration_bounds = array<i64: 2, 1>, scalar_prefetch = 0 : i64, scratch_operands = 0 : i64, tpu.core_type = #tpu.core_type<tc>, window_params = [{transform_indices = @transform_0, window_bounds = array<i64: 1, 4, 8, 32>}, {pipeline_mode = #tpu.pipeline_mode<synchronous>, transform_indices = @transform_1, window_bounds = array<i64: 32, 8>}, {pipeline_mode = #tpu.pipeline_mode<synchronous>, transform_indices = @transform_2, window_bounds = array<i64: 32, 8>}, {pipeline_mode = #tpu.pipeline_mode<synchronous>, transform_indices = @transform_3, window_bounds = array<i64: 32, 32>}, {pipeline_mode = #tpu.pipeline_mode<synchronous>, transform_indices = @transform_4, window_bounds = array<i64: 32, 32>}, {pipeline_mode = #tpu.pipeline_mode<synchronous>, transform_indices = @transform_5, window_bounds = array<i64: 8, 1, 1>}, {pipeline_mode = #tpu.pipeline_mode<synchronous>, transform_indices = @transform_6, window_bounds = array<i64: 8, 1, 1>}, {transform_indices = @transform_7, window_bounds = array<i64: 1, 8, 8, 8>}]} {
    %c0 = arith.constant 0 : index
    %c0_0 = arith.constant 0 : index
    %c0_1 = arith.constant 0 : index
    %c0_2 = arith.constant 0 : index
    %0 = vector.load %arg2[%c0, %c0_0, %c0_1, %c0_2] : memref<1x4x8x32xf32, #tpu.memory_space<vmem>>, vector<1x4x8x32xf32>
    %1 = vector.shape_cast %0 : vector<1x4x8x32xf32> to vector<4x8x32xf32>
    %cst = arith.constant 0.000000e+00 : f32
    %2 = vector.broadcast %cst : f32 to vector<4x8x32xf32>
    %3 = arith.maximumf %1, %2 : vector<4x8x32xf32>
    %4 = vector.shape_cast %3 : vector<4x8x32xf32> to vector<32x32xf32>
    %c0_3 = arith.constant 0 : index
    %c0_4 = arith.constant 0 : index
    %5 = vector.load %arg3[%c0_3, %c0_4] : memref<32x8xf32, #tpu.memory_space<vmem>>, vector<32x8xf32>
    %cst_5 = arith.constant dense<0.000000e+00> : vector<32x8xf32>
    %6 = tpu.matmul %4, %5, %cst_5 {dimension_numbers = #tpu.dot_dimension_numbers<[1], [0], [0], [1], [0, 0, 1, 1], [], []>} : vector<32x32xf32>, vector<32x8xf32>, vector<32x8xf32> -> vector<32x8xf32>
    %c0_6 = arith.constant 0 : index
    %c0_7 = arith.constant 0 : index
    %7 = vector.load %arg4[%c0_6, %c0_7] : memref<32x8xf32, #tpu.memory_space<vmem>>, vector<32x8xf32>
    %cst_8 = arith.constant dense<0.000000e+00> : vector<32x8xf32>
    %8 = tpu.matmul %4, %7, %cst_8 {dimension_numbers = #tpu.dot_dimension_numbers<[1], [0], [0], [1], [0, 0, 1, 1], [], []>} : vector<32x32xf32>, vector<32x8xf32>, vector<32x8xf32> -> vector<32x8xf32>
    %c0_9 = arith.constant 0 : index
    %c0_10 = arith.constant 0 : index
    %9 = vector.load %arg5[%c0_9, %c0_10] : memref<32x32xf32, #tpu.memory_space<vmem>>, vector<32x32xf32>
    %cst_11 = arith.constant dense<0.000000e+00> : vector<32x8xf32>
    %10 = tpu.matmul %9, %6, %cst_11 {dimension_numbers = #tpu.dot_dimension_numbers<[1], [0], [0], [1], [0, 0, 1, 1], [], []>} : vector<32x32xf32>, vector<32x8xf32>, vector<32x8xf32> -> vector<32x8xf32>
    %c0_12 = arith.constant 0 : index
    %c0_13 = arith.constant 0 : index
    %11 = vector.load %arg6[%c0_12, %c0_13] : memref<32x32xf32, #tpu.memory_space<vmem>>, vector<32x32xf32>
    %cst_14 = arith.constant dense<0.000000e+00> : vector<32x8xf32>
    %12 = tpu.matmul %11, %8, %cst_14 {dimension_numbers = #tpu.dot_dimension_numbers<[1], [0], [0], [1], [0, 0, 1, 1], [], []>} : vector<32x32xf32>, vector<32x8xf32>, vector<32x8xf32> -> vector<32x8xf32>
    %13 = vector.shape_cast %10 : vector<32x8xf32> to vector<4x8x8xf32>
    %14 = vector.shape_cast %12 : vector<32x8xf32> to vector<4x8x8xf32>
    %c0_15 = arith.constant 0 : index
    %c0_16 = arith.constant 0 : index
    %c0_17 = arith.constant 0 : index
    %15 = vector.load %arg7[%c0_15, %c0_16, %c0_17] : memref<8x1x1xf32, #tpu.memory_space<vmem>>, vector<8x1x1xf32>
    %c0_18 = arith.constant 0 : index
    %c0_19 = arith.constant 0 : index
    %c0_20 = arith.constant 0 : index
    %16 = vector.load %arg8[%c0_18, %c0_19, %c0_20] : memref<8x1x1xf32, #tpu.memory_space<vmem>>, vector<8x1x1xf32>
    %17 = vector.extract_strided_slice %15 {offsets = [0, 0, 0], sizes = [4, 1, 1], strides = [1, 1, 1]} : vector<8x1x1xf32> to vector<4x1x1xf32>
    %18 = vector.broadcast %17 : vector<4x1x1xf32> to vector<4x8x8xf32>
    %19 = arith.mulf %13, %18 : vector<4x8x8xf32>
    %20 = vector.extract_strided_slice %16 {offsets = [0, 0, 0], sizes = [4, 1, 1], strides = [1, 1, 1]} : vector<8x1x1xf32> to vector<4x1x1xf32>
    %21 = vector.broadcast %20 : vector<4x1x1xf32> to vector<4x8x8xf32>
    %22 = arith.addf %19, %21 : vector<4x8x8xf32>
    %c0_21 = arith.constant 0 : index
    %c0_22 = arith.constant 0 : index
    %c0_23 = arith.constant 0 : index
    %c0_24 = arith.constant 0 : index
    %23 = vector.load %arg9[%c0_21, %c0_22, %c0_23, %c0_24] : memref<1x8x8x8xf32, #tpu.memory_space<vmem>>, vector<1x4x8x8xf32>
    %24 = vector.shape_cast %23 : vector<1x4x8x8xf32> to vector<4x8x8xf32>
    %25 = vector.shape_cast %22 : vector<4x8x8xf32> to vector<1x4x8x8xf32>
    tpu.vector_store %arg9[%c0_21, %c0_22, %c0_23, %c0_24], %25 {strides = array<i32>} : memref<1x8x8x8xf32, #tpu.memory_space<vmem>>, vector<1x4x8x8xf32>,
    %26 = vector.extract_strided_slice %15 {offsets = [4, 0, 0], sizes = [4, 1, 1], strides = [1, 1, 1]} : vector<8x1x1xf32> to vector<4x1x1xf32>
    %27 = vector.broadcast %26 : vector<4x1x1xf32> to vector<4x8x8xf32>
    %28 = arith.mulf %14, %27 : vector<4x8x8xf32>
    %29 = vector.extract_strided_slice %16 {offsets = [4, 0, 0], sizes = [4, 1, 1], strides = [1, 1, 1]} : vector<8x1x1xf32> to vector<4x1x1xf32>
    %30 = vector.broadcast %29 : vector<4x1x1xf32> to vector<4x8x8xf32>
    %31 = arith.addf %28, %30 : vector<4x8x8xf32>
    %c0_25 = arith.constant 0 : index
    %c4 = arith.constant 4 : index
    %c0_26 = arith.constant 0 : index
    %c0_27 = arith.constant 0 : index
    %32 = vector.load %arg9[%c0_25, %c4, %c0_26, %c0_27] : memref<1x8x8x8xf32, #tpu.memory_space<vmem>>, vector<1x4x8x8xf32>
    %33 = vector.shape_cast %32 : vector<1x4x8x8xf32> to vector<4x8x8xf32>
    %34 = vector.shape_cast %31 : vector<4x8x8xf32> to vector<1x4x8x8xf32>
    tpu.vector_store %arg9[%c0_25, %c4, %c0_26, %c0_27], %34 {strides = array<i32>} : memref<1x8x8x8xf32, #tpu.memory_space<vmem>>, vector<1x4x8x8xf32>,
    return
  }
  func.func @transform_0(%arg0: i32, %arg1: i32) -> (i32, i32, i32, i32) {
    %c0_i32 = arith.constant 0 : i32
    %c0_i32_0 = arith.constant 0 : i32
    %c0_i32_1 = arith.constant 0 : i32
    return %arg0, %c0_i32, %arg1, %c0_i32_0 : i32, i32, i32, i32
  }
  func.func @transform_1(%arg0: i32, %arg1: i32) -> (i32, i32) {
    %c0_i32 = arith.constant 0 : i32
    %c0_i32_0 = arith.constant 0 : i32
    %c0_i32_1 = arith.constant 0 : i32
    return %c0_i32, %c0_i32_0 : i32, i32
  }
  func.func @transform_2(%arg0: i32, %arg1: i32) -> (i32, i32) {
    %c0_i32 = arith.constant 0 : i32
    %c0_i32_0 = arith.constant 0 : i32
    %c0_i32_1 = arith.constant 0 : i32
    return %c0_i32, %c0_i32_0 : i32, i32
  }
  func.func @transform_3(%arg0: i32, %arg1: i32) -> (i32, i32) {
    %c0_i32 = arith.constant 0 : i32
    %c0_i32_0 = arith.constant 0 : i32
    %c0_i32_1 = arith.constant 0 : i32
    return %c0_i32, %c0_i32_0 : i32, i32
  }
  func.func @transform_4(%arg0: i32, %arg1: i32) -> (i32, i32) {
    %c0_i32 = arith.constant 0 : i32
    %c0_i32_0 = arith.constant 0 : i32
    %c0_i32_1 = arith.constant 0 : i32
    return %c0_i32, %c0_i32_0 : i32, i32
  }
  func.func @transform_5(%arg0: i32, %arg1: i32) -> (i32, i32, i32) {
    %c0_i32 = arith.constant 0 : i32
    %c0_i32_0 = arith.constant 0 : i32
    %c0_i32_1 = arith.constant 0 : i32
    %c0_i32_2 = arith.constant 0 : i32
    return %c0_i32, %c0_i32_0, %c0_i32_1 : i32, i32, i32
  }
  func.func @transform_6(%arg0: i32, %arg1: i32) -> (i32, i32, i32) {
    %c0_i32 = arith.constant 0 : i32
    %c0_i32_0 = arith.constant 0 : i32
    %c0_i32_1 = arith.constant 0 : i32
    %c0_i32_2 = arith.constant 0 : i32
    return %c0_i32, %c0_i32_0, %c0_i32_1 : i32, i32, i32
  }
  func.func @transform_7(%arg0: i32, %arg1: i32) -> (i32, i32, i32, i32) {
    %c0_i32 = arith.constant 0 : i32
    %c0_i32_0 = arith.constant 0 : i32
    %c0_i32_1 = arith.constant 0 : i32
    return %arg0, %c0_i32, %arg1, %c0_i32_0 : i32, i32, i32, i32
  }
}

</mosaic_0001>

<llo_original>
// kernel: tpu_custom_call.1
$region0: #{tpu_custom_call.1}
  #allocation0 [shape = 'u32[]', space=smem, size = 0x4, offset = 0x4, fixed_abs, tag = 'smem constant byte address 0x4 - core index']
  #allocation1 [shape = 'u32[144,128]{1,0:T(1,128)}', space=vmem, size = 0x12000, scoped, tag = 'internal scratch']
  %s0 = inlined_call_operand.hbm [shape: f32[2,4,8,32], index: 0, kind: input, shape index: {}]
  %s1 = inlined_call_operand.hbm [shape: f32[32,8], index: 1, kind: input, shape index: {}]
  %s2 = inlined_call_operand.hbm [shape: f32[32,8], index: 2, kind: input, shape index: {}]
  %s3 = inlined_call_operand.hbm [shape: f32[32,32], index: 3, kind: input, shape index: {}]
  %s4 = inlined_call_operand.hbm [shape: f32[32,32], index: 4, kind: input, shape index: {}]
  %s5 = inlined_call_operand.hbm [shape: f32[8,1,1], index: 5, kind: input, shape index: {}]
  %s6 = inlined_call_operand.hbm [shape: f32[8,1,1], index: 6, kind: input, shape index: {}]
  %s7 = inlined_call_operand.hbm [shape: f32[2,8,8,8], index: 7, kind: output, shape index: {}]
  %s8 = sld [smem:[#allocation0]]
  $region89: #{tpu_custom_call.1} parent=0
    _
  %s10 = ssub.s32 1, %s8
  %s11 = scalar_select 0, %s10, %s8
  $region1: #{tpu_custom_call.1} parent=0
    #allocation2 [shape = 'u8[32768]{0}', space=vmem, size = 0x8000, scoped, tag = 'input window, operand 0']
    #allocation3 [shape = 's32[2]{0}', space=sflag, size = 0x8, scoped, tag = 'scoped memory for tpu_custom_call.1']
    #allocation4 [shape = 's32[2]{0}', space=sflag, size = 0x8, scoped, tag = 'scoped memory for tpu_custom_call.1']
    #allocation5 [shape = 'u8[16384]{0}', space=vmem, size = 0x4000, scoped, tag = 'input window, operand 1, single buffered']
    #allocation6 [shape = 's32[1]{0}', space=sflag, size = 0x4, scoped, tag = 'scoped memory for tpu_custom_call.1']
    #allocation7 [shape = 'u8[16384]{0}', space=vmem, size = 0x4000, scoped, tag = 'input window, operand 2, single buffered']
    #allocation8 [shape = 'u8[16384]{0}', space=vmem, size = 0x4000, scoped, tag = 'input window, operand 3, single buffered']
    #allocation9 [shape = 's32[1]{0}', space=sflag, size = 0x4, scoped, tag = 'scoped memory for tpu_custom_call.1']
    #allocation10 [shape = 'u8[16384]{0}', space=vmem, size = 0x4000, scoped, tag = 'input window, operand 4, single buffered']
    #allocation11 [shape = 'u8[4096]{0}', space=vmem, size = 0x1000, scoped, tag = 'input window, operand 5, single buffered']
    #allocation12 [shape = 's32[1]{0}', space=sflag, size = 0x4, scoped, tag = 'scoped memory for tpu_custom_call.1']
    #allocation13 [shape = 'u8[4096]{0}', space=vmem, size = 0x1000, scoped, tag = 'input window, operand 6, single buffered']
    #allocation14 [shape = 'u8[65536]{0}', space=vmem, size = 0x10000, scoped, tag = 'output window, operand 0']
    %12 = vsyncpa [#allocation3], 0
    %s13 = scalar_lea.sflag [#allocation3], 1
    %14 = vsyncpa %s13, 0
    %15 = vsyncpa [#allocation6], 0
    %16 = vsyncpa [#allocation9], 0
    %17 = vsyncpa [#allocation12], 0
    %18 = vsyncpa [#allocation4], 0
    %s19 = scalar_lea.sflag [#allocation4], 1
    %20 = vsyncpa %s19, 0
    loop: start=0, step=1, limit=4
    $region2: #{tpu_custom_call.1} parent=1 // loop_pre_header
      _
    $region3: #{tpu_custom_call.1} parent=1 // loop_header
      %s22 = sphi 0, %s26
      %p23 = scmp.ge.s32.totalorder %s22, 4
      %s29 = sphi 0, %s41
      %s30 = sphi 0, %s37
      %s31 = sphi 0, %s29
      %s32 = sphi 0, %s30
      %s33 = sphi 0, %s31
      %s34 = sphi 0, %s32
      %s46 = sphi 0, %s48
      %s49 = sphi 0, %s46
      %s50 = sphi 0, %s49
      %s66 = sphi 0, %s50
      %s70 = sphi 0, %s70
      %s72 = sphi 0, %s70
      %s73 = sphi 0, %s72
      %s87 = sphi 0, %s73
      %s91 = sphi 0, %s91
      %s93 = sphi 0, %s91
      %s94 = sphi 0, %s93
      %s108 = sphi 0, %s94
      %s112 = sphi 0, %s112
      %s114 = sphi 0, %s112
      %s115 = sphi 0, %s114
      %s129 = sphi 0, %s115
      %s133 = sphi 0, %s133
      %s135 = sphi 0, %s133
      %s136 = sphi 0, %s135
      %s150 = sphi 0, %s136
      %s154 = sphi 0, %s154
      %s156 = sphi 0, %s154
      %s157 = sphi 0, %s156
      %s171 = sphi 0, %s157
      %s175 = sphi 0, %s175
      %s177 = sphi 0, %s175
      %s178 = sphi 0, %s177
      %s192 = sphi 0, %s178
      %s200 = sphi 0, %s202
      %s203 = sphi 0, %s200
      %s204 = sphi 0, %s203
      %s220 = sphi 0, %s204
    $region4: #{tpu_custom_call.1} parent=1 // loop_header_branch
      %25 = sbr.rel (%p23) target = $region8
    $region5: #{tpu_custom_call.1} parent=1 // loop_body
      %s27 = ssub.s32 %s22, 1
      %s28 = ssub.s32 %s22, 2
      %s35 = sadd.s32 1, %s30
      %p36 = scmp.ge.s32.totalorder %s35, 1
      %s37 = scalar_select %p36, 0, %s35
      %s38 = sadd.s32 1, %s29
      %s39 = scalar_select %p36, %s38, %s29
      %p40 = scmp.ge.s32.totalorder %s39, 2
      %s41 = scalar_select %p40, 0, %s39
      %s42 = ssub.s32 %s29, %s41
      %s43 = ssub.s32 %s30, %s37
      %s44 = sor.u32 %s42, %s43
      %p45 = scmp.eq.s32.totalorder %s44, 0
      %s47 = sadd.s32 %s46, 1
      %s48 = scalar_select %p45, %s46, %s47
      %p51 = pneg %p45
      %p52 = scmp.eq.s32.totalorder %s22, 1
      %p53 = por %p51, %p52
      %p54 = scmp.ne.s32.totalorder %s46, %s49
      %p55 = scmp.eq.s32.totalorder %s22, 0
      %p56 = por %p54, %p55
      %p57 = scmp.ne.s32.totalorder %s46, %s49
      %p58 = scmp.eq.s32.totalorder %s27, 1
      %p59 = por %p57, %p58
      %p60 = scmp.ne.s32.totalorder %s49, %s50
      %p61 = scmp.eq.s32.totalorder %s27, 0
      %p62 = por %p60, %p61
      %p63 = scmp.ne.s32.totalorder %s49, %s50
      %p64 = scmp.eq.s32.totalorder %s28, 1
      %p65 = por %p63, %p64
      %p67 = scmp.ne.s32.totalorder %s50, %s66
      %p68 = scmp.eq.s32.totalorder %s28, 0
      %p69 = por %p67, %p68
      %s71 = sadd.s32 %s70, 1
      %p74 = scmp.eq.s32.totalorder %s22, 1
      %p75 = scmp.ne.s32.totalorder %s70, %s72
      %p76 = scmp.eq.s32.totalorder %s22, 0
      %p77 = por %p75, %p76
      %p78 = scmp.ne.s32.totalorder %s70, %s72
      %p79 = scmp.eq.s32.totalorder %s27, 1
      %p80 = por %p78, %p79
      %p81 = scmp.ne.s32.totalorder %s72, %s73
      %p82 = scmp.eq.s32.totalorder %s27, 0
      %p83 = por %p81, %p82
      %p84 = scmp.ne.s32.totalorder %s72, %s73
      %p85 = scmp.eq.s32.totalorder %s28, 1
      %p86 = por %p84, %p85
      %p88 = scmp.ne.s32.totalorder %s73, %s87
      %p89 = scmp.eq.s32.totalorder %s28, 0
      %p90 = por %p88, %p89
      %s92 = sadd.s32 %s91, 1
      %p95 = scmp.eq.s32.totalorder %s22, 1
      %p96 = scmp.ne.s32.totalorder %s91, %s93
      %p97 = scmp.eq.s32.totalorder %s22, 0
      %p98 = por %p96, %p97
      %p99 = scmp.ne.s32.totalorder %s91, %s93
      %p100 = scmp.eq.s32.totalorder %s27, 1
      %p101 = por %p99, %p100
      %p102 = scmp.ne.s32.totalorder %s93, %s94
      %p103 = scmp.eq.s32.totalorder %s27, 0
      %p104 = por %p102, %p103
      %p105 = scmp.ne.s32.totalorder %s93, %s94
      %p106 = scmp.eq.s32.totalorder %s28, 1
      %p107 = por %p105, %p106
      %p109 = scmp.ne.s32.totalorder %s94, %s108
      %p110 = scmp.eq.s32.totalorder %s28, 0
      %p111 = por %p109, %p110
      %s113 = sadd.s32 %s112, 1
      %p116 = scmp.eq.s32.totalorder %s22, 1
      %p117 = scmp.ne.s32.totalorder %s112, %s114
      %p118 = scmp.eq.s32.totalorder %s22, 0
      %p119 = por %p117, %p118
      %p120 = scmp.ne.s32.totalorder %s112, %s114
      %p121 = scmp.eq.s32.totalorder %s27, 1
      %p122 = por %p120, %p121
      %p123 = scmp.ne.s32.totalorder %s114, %s115
      %p124 = scmp.eq.s32.totalorder %s27, 0
      %p125 = por %p123, %p124
      %p126 = scmp.ne.s32.totalorder %s114, %s115
      %p127 = scmp.eq.s32.totalorder %s28, 1
      %p128 = por %p126, %p127
      %p130 = scmp.ne.s32.totalorder %s115, %s129
      %p131 = scmp.eq.s32.totalorder %s28, 0
      %p132 = por %p130, %p131
      %s134 = sadd.s32 %s133, 1
      %p137 = scmp.eq.s32.totalorder %s22, 1
      %p138 = scmp.ne.s32.totalorder %s133, %s135
      %p139 = scmp.eq.s32.totalorder %s22, 0
      %p140 = por %p138, %p139
      %p141 = scmp.ne.s32.totalorder %s133, %s135
      %p142 = scmp.eq.s32.totalorder %s27, 1
      %p143 = por %p141, %p142
      %p144 = scmp.ne.s32.totalorder %s135, %s136
      %p145 = scmp.eq.s32.totalorder %s27, 0
      %p146 = por %p144, %p145
      %p147 = scmp.ne.s32.totalorder %s135, %s136
      %p148 = scmp.eq.s32.totalorder %s28, 1
      %p149 = por %p147, %p148
      %p151 = scmp.ne.s32.totalorder %s136, %s150
      %p152 = scmp.eq.s32.totalorder %s28, 0
      %p153 = por %p151, %p152
      %s155 = sadd.s32 %s154, 1
      %p158 = scmp.eq.s32.totalorder %s22, 1
      %p159 = scmp.ne.s32.totalorder %s154, %s156
      %p160 = scmp.eq.s32.totalorder %s22, 0
      %p161 = por %p159, %p160
      %p162 = scmp.ne.s32.totalorder %s154, %s156
      %p163 = scmp.eq.s32.totalorder %s27, 1
      %p164 = por %p162, %p163
      %p165 = scmp.ne.s32.totalorder %s156, %s157
      %p166 = scmp.eq.s32.totalorder %s27, 0
      %p167 = por %p165, %p166
      %p168 = scmp.ne.s32.totalorder %s156, %s157
      %p169 = scmp.eq.s32.totalorder %s28, 1
      %p170 = por %p168, %p169
      %p172 = scmp.ne.s32.totalorder %s157, %s171
      %p173 = scmp.eq.s32.totalorder %s28, 0
      %p174 = por %p172, %p173
      %s176 = sadd.s32 %s175, 1
      %p179 = scmp.eq.s32.totalorder %s22, 1
      %p180 = scmp.ne.s32.totalorder %s175, %s177
      %p181 = scmp.eq.s32.totalorder %s22, 0
      %p182 = por %p180, %p181
      %p183 = scmp.ne.s32.totalorder %s175, %s177
      %p184 = scmp.eq.s32.totalorder %s27, 1
      %p185 = por %p183, %p184
      %p186 = scmp.ne.s32.totalorder %s177, %s178
      %p187 = scmp.eq.s32.totalorder %s27, 0
      %p188 = por %p186, %p187
      %p189 = scmp.ne.s32.totalorder %s177, %s178
      %p190 = scmp.eq.s32.totalorder %s28, 1
      %p191 = por %p189, %p190
      %p193 = scmp.ne.s32.totalorder %s178, %s192
      %p194 = scmp.eq.s32.totalorder %s28, 0
      %p195 = por %p193, %p194
      %s196 = ssub.s32 %s29, %s41
      %s197 = ssub.s32 %s30, %s37
      %s198 = sor.u32 %s196, %s197
      %p199 = scmp.eq.s32.totalorder %s198, 0
      %s201 = sadd.s32 %s200, 1
      %s202 = scalar_select %p199, %s200, %s201
      %p205 = pneg %p199
      %p206 = scmp.eq.s32.totalorder %s22, 1
      %p207 = por %p205, %p206
      %p208 = scmp.ne.s32.totalorder %s200, %s203
      %p209 = scmp.eq.s32.totalorder %s22, 0
      %p210 = por %p208, %p209
      %p211 = scmp.ne.s32.totalorder %s200, %s203
      %p212 = scmp.eq.s32.totalorder %s27, 1
      %p213 = por %p211, %p212
      %p214 = scmp.ne.s32.totalorder %s203, %s204
      %p215 = scmp.eq.s32.totalorder %s27, 0
      %p216 = por %p214, %p215
      %p217 = scmp.ne.s32.totalorder %s203, %s204
      %p218 = scmp.eq.s32.totalorder %s28, 1
      %p219 = por %p217, %p218
      %p221 = scmp.ne.s32.totalorder %s204, %s220
      %p222 = scmp.eq.s32.totalorder %s28, 0
      %p223 = por %p221, %p222
      %p224 = scmp.le.s32.totalorder 1, %s22
      %p225 = scmp.lt.s32.totalorder %s22, 3
      %p226 = pnand %p224, %p225
      %p227 = pneg %p226
      // Predicated region
      $region9: #{tpu_custom_call.1} parent=5 // pred_check
        _
      $region10: #{tpu_custom_call.1} parent=5 // pred_check_branch
        %229 = sbr.rel (%p226) target = $region12
      $region11: #{tpu_custom_call.1} parent=5 // pred_region
        %s230 = ssub.s32 %s22, 1
        // Predicated region
        $region13: #{tpu_custom_call.1} parent=11 // pred_check
          %p231 = pneg %p83
        $region14: #{tpu_custom_call.1} parent=11 // pred_check_branch
          %233 = sbr.rel (%p231) target = $region16
        $region15: #{tpu_custom_call.1} parent=11 // pred_region
          %s235 = ssub.s32 512, 512
          %236 = vsyncadd [#allocation6], %s235
          %s237 = sshll.u32 [#allocation5], 4
          %s238 = int_to_ptr.vmem [resolvable:$true] %s237
          %243 = dma.hbm_to_vmem [thread:$0]  %s1, 512, %s238, [#allocation6], 128, 128, 8
        $region16: #{tpu_custom_call.1} parent=11 // pred_fallthru
          _
        // Predicated region
        $region17: #{tpu_custom_call.1} parent=11 // pred_check
          %p244 = pneg %p104
        $region18: #{tpu_custom_call.1} parent=11 // pred_check_branch
          %246 = sbr.rel (%p244) target = $region20
        $region19: #{tpu_custom_call.1} parent=11 // pred_region
          %s248 = ssub.s32 512, 512
          %249 = vsyncadd [#allocation6], %s248
          %s250 = sshll.u32 [#allocation7], 4
          %s251 = int_to_ptr.vmem [resolvable:$true] %s250
          %256 = dma.hbm_to_vmem [thread:$0]  %s2, 512, %s251, [#allocation6], 128, 128, 8
        $region20: #{tpu_custom_call.1} parent=11 // pred_fallthru
          _
        // Predicated region
        $region21: #{tpu_custom_call.1} parent=11 // pred_check
          %p257 = pneg %p125
        $region22: #{tpu_custom_call.1} parent=11 // pred_check_branch
          %259 = sbr.rel (%p257) target = $region24
        $region23: #{tpu_custom_call.1} parent=11 // pred_region
          %s261 = ssub.s32 512, 512
          %262 = vsyncadd [#allocation9], %s261
          %s263 = sshll.u32 [#allocation8], 4
          %s264 = int_to_ptr.vmem [resolvable:$true] %s263
          %269 = dma.hbm_to_vmem [thread:$0]  %s3, 512, %s264, [#allocation9], 128, 128, 8
        $region24: #{tpu_custom_call.1} parent=11 // pred_fallthru
          _
        // Predicated region
        $region25: #{tpu_custom_call.1} parent=11 // pred_check
          %p270 = pneg %p146
        $region26: #{tpu_custom_call.1} parent=11 // pred_check_branch
          %272 = sbr.rel (%p270) target = $region28
        $region27: #{tpu_custom_call.1} parent=11 // pred_region
          %s274 = ssub.s32 512, 512
          %275 = vsyncadd [#allocation9], %s274
          %s276 = sshll.u32 [#allocation10], 4
          %s277 = int_to_ptr.vmem [resolvable:$true] %s276
          %282 = dma.hbm_to_vmem [thread:$0]  %s4, 512, %s277, [#allocation9], 128, 128, 8
        $region28: #{tpu_custom_call.1} parent=11 // pred_fallthru
          _
        // Predicated region
        $region29: #{tpu_custom_call.1} parent=11 // pred_check
          %p283 = pneg %p167
        $region30: #{tpu_custom_call.1} parent=11 // pred_check_branch
          %285 = sbr.rel (%p283) target = $region32
        $region31: #{tpu_custom_call.1} parent=11 // pred_region
          %s287 = ssub.s32 128, 128
          %288 = vsyncadd [#allocation12], %s287
          %s289 = sshll.u32 [#allocation11], 4
          %s290 = int_to_ptr.vmem [resolvable:$true] %s289
          %295 = dma.hbm_to_vmem [thread:$0]  %s5, 128, %s290, [#allocation12], 16, 16, 1
        $region32: #{tpu_custom_call.1} parent=11 // pred_fallthru
          _
        // Predicated region
        $region33: #{tpu_custom_call.1} parent=11 // pred_check
          %p296 = pneg %p188
        $region34: #{tpu_custom_call.1} parent=11 // pred_check_branch
          %298 = sbr.rel (%p296) target = $region36
        $region35: #{tpu_custom_call.1} parent=11 // pred_region
          %s300 = ssub.s32 128, 128
          %301 = vsyncadd [#allocation12], %s300
          %s302 = sshll.u32 [#allocation13], 4
          %s303 = int_to_ptr.vmem [resolvable:$true] %s302
          %308 = dma.hbm_to_vmem [thread:$0]  %s6, 128, %s303, [#allocation12], 16, 16, 1
        $region36: #{tpu_custom_call.1} parent=11 // pred_fallthru
          _
      $region12: #{tpu_custom_call.1} parent=5 // pred_fallthru
        _
      %p309 = scmp.lt.s32.totalorder %s22, 2
      // Predicated region
      $region37: #{tpu_custom_call.1} parent=5 // pred_check
        %p310 = pneg %p309
      $region38: #{tpu_custom_call.1} parent=5 // pred_check_branch
        %312 = sbr.rel (%p310) target = $region40
      $region39: #{tpu_custom_call.1} parent=5 // pred_region
        // Predicated region
        $region41: #{tpu_custom_call.1} parent=39 // pred_check
          %p313 = pneg %p56
        $region42: #{tpu_custom_call.1} parent=39 // pred_check_branch
          %315 = sbr.rel (%p313) target = $region44
        $region43: #{tpu_custom_call.1} parent=39 // pred_region
          %s316 = sand.u32 %s46, 1
          %s317 = scalar_lea.sflag [#allocation3], %s316
          %s318 = sand.u32 %s46, 1
          %s319 = smul.addr %s318, 32
          %s320 = scalar_lea.vmem [#allocation2], %s319
          %s322 = ssub.s32 512, 512
          %323 = vsyncadd %s317, %s322
          %s324 = smul.addr %s29, 4
          %s325 = sadd.s32 %s30, %s324
          %s326 = smul.addr %s325, 128
          %s327 = scalar_lea.hbm %s0, %s326
          %s328 = sshll.u32 %s320, 4
          %s329 = int_to_ptr.vmem [resolvable:$true] %s328
          %334 = dma.hbm_to_vmem [thread:$0]  %s327, 512, %s329, %s317, 128, 128, 8
        $region44: #{tpu_custom_call.1} parent=39 // pred_fallthru
          _
      $region40: #{tpu_custom_call.1} parent=5 // pred_fallthru
        _
      %p335 = scmp.le.s32.totalorder 1, %s22
      %p336 = scmp.lt.s32.totalorder %s22, 3
      %p337 = pnand %p335, %p336
      %p338 = pneg %p337
      // Predicated region
      $region45: #{tpu_custom_call.1} parent=5 // pred_check
        _
      $region46: #{tpu_custom_call.1} parent=5 // pred_check_branch
        %340 = sbr.rel (%p337) target = $region48
      $region47: #{tpu_custom_call.1} parent=5 // pred_region
        %s341 = ssub.s32 %s22, 1
        %s342 = sand.u32 %s49, 1
        %s343 = scalar_lea.sflag [#allocation3], %s342
        %s344 = sand.u32 %s49, 1
        %s345 = smul.addr %s344, 32
        %s346 = scalar_lea.vmem [#allocation2], %s345
        // Predicated region
        $region49: #{tpu_custom_call.1} parent=47 // pred_check
          %p347 = pneg %p62
        $region50: #{tpu_custom_call.1} parent=47 // pred_check_branch
          %349 = sbr.rel (%p347) target = $region52
        $region51: #{tpu_custom_call.1} parent=47 // pred_region
          %350 = dma.done %s343, 512
        $region52: #{tpu_custom_call.1} parent=47 // pred_fallthru
          _
        // Predicated region
        $region53: #{tpu_custom_call.1} parent=47 // pred_check
          %p351 = pneg %p83
        $region54: #{tpu_custom_call.1} parent=47 // pred_check_branch
          %353 = sbr.rel (%p351) target = $region56
        $region55: #{tpu_custom_call.1} parent=47 // pred_region
          %354 = dma.done [#allocation6], 512
        $region56: #{tpu_custom_call.1} parent=47 // pred_fallthru
          _
        // Predicated region
        $region57: #{tpu_custom_call.1} parent=47 // pred_check
          %p355 = pneg %p104
        $region58: #{tpu_custom_call.1} parent=47 // pred_check_branch
          %357 = sbr.rel (%p355) target = $region60
        $region59: #{tpu_custom_call.1} parent=47 // pred_region
          %358 = dma.done [#allocation6], 512
        $region60: #{tpu_custom_call.1} parent=47 // pred_fallthru
          _
        // Predicated region
        $region61: #{tpu_custom_call.1} parent=47 // pred_check
          %p359 = pneg %p125
        $region62: #{tpu_custom_call.1} parent=47 // pred_check_branch
          %361 = sbr.rel (%p359) target = $region64
        $region63: #{tpu_custom_call.1} parent=47 // pred_region
          %362 = dma.done [#allocation9], 512
        $region64: #{tpu_custom_call.1} parent=47 // pred_fallthru
          _
        // Predicated region
        $region65: #{tpu_custom_call.1} parent=47 // pred_check
          %p363 = pneg %p146
        $region66: #{tpu_custom_call.1} parent=47 // pred_check_branch
          %365 = sbr.rel (%p363) target = $region68
        $region67: #{tpu_custom_call.1} parent=47 // pred_region
          %366 = dma.done [#allocation9], 512
        $region68: #{tpu_custom_call.1} parent=47 // pred_fallthru
          _
        // Predicated region
        $region69: #{tpu_custom_call.1} parent=47 // pred_check
          %p367 = pneg %p167
        $region70: #{tpu_custom_call.1} parent=47 // pred_check_branch
          %369 = sbr.rel (%p367) target = $region72
        $region71: #{tpu_custom_call.1} parent=47 // pred_region
          %370 = dma.done [#allocation12], 128
        $region72: #{tpu_custom_call.1} parent=47 // pred_fallthru
          _
        // Predicated region
        $region73: #{tpu_custom_call.1} parent=47 // pred_check
          %p371 = pneg %p188
        $region74: #{tpu_custom_call.1} parent=47 // pred_check_branch
          %373 = sbr.rel (%p371) target = $region76
        $region75: #{tpu_custom_call.1} parent=47 // pred_region
          %374 = dma.done [#allocation12], 128
        $region76: #{tpu_custom_call.1} parent=47 // pred_fallthru
          _
        %s375 = sand.u32 %s49, 1
        %s376 = scalar_lea.sflag [#allocation3], %s375
        %s377 = sand.u32 %s49, 1
        %s378 = smul.addr %s377, 32
        %s379 = scalar_lea.vmem [#allocation2], %s378
        %p380 = pneg %p62
        %p381 = pneg %p59
        %p382 = pneg %p83
        %p383 = pneg %p80
        %p384 = pneg %p104
        %p385 = pneg %p101
        %p386 = pneg %p125
        %p387 = pneg %p122
        %p388 = pneg %p146
        %p389 = pneg %p143
        %p390 = pneg %p167
        %p391 = pneg %p164
        %p392 = pneg %p188
        %p393 = pneg %p185
        %p394 = pneg %p216
        %p395 = pneg %p213
        %s396 = sand.u32 %s203, 1
        %s397 = scalar_lea.sflag [#allocation4], %s396
        %s398 = sand.u32 %s203, 1
        %s399 = smul.addr %s398, 64
        %s400 = scalar_lea.vmem [#allocation14], %s399
        %v401 = vld [vmem:[%s346] sm:$0xff]
        %v402 = vld [vmem:[%s346 + $0x8] sm:$0xff]
        %v403 = vld [vmem:[%s346 + $0x10] sm:$0xff]
        %v404 = vld [vmem:[%s346 + $0x18] sm:$0xff]
        %v405 = vmax.f32 %v401, 0.0
        %v406 = vmax.f32 %v402, 0.0
        %v407 = vmax.f32 %v403, 0.0
        %v408 = vmax.f32 %v404, 0.0
        %v409 = vld [vmem:[#allocation5] sm:$0xff]
        %v410 = vld [vmem:[#allocation5 + $0x8] sm:$0xff]
        %v411 = vld [vmem:[#allocation5 + $0x10] sm:$0xff]
        %v412 = vld [vmem:[#allocation5 + $0x18] sm:$0xff]
        %vm413 = vcmask 261120
        %v415 = vsel %vm413, %v405, 0
        %v418 = vsel %vm413, %v406, 0
        %v421 = vsel %vm413, %v407, 0
        %v424 = vsel %vm413, %v408, 0
        %426 = vmatprep.subr.mxu0 0.0
        %427 = vmatpush1.msra.mxu0 %v409
        %428 = vmatprep.subr.mxu0 0.0
        %429 = vmatpush1.msra.mxu0 %v410
        %430 = vmatprep.subr.mxu0 0.0
        %431 = vmatpush1.msra.mxu0 %v411
        %432 = vmatprep.subr.mxu0 0.0
        %433 = vmatpush1.msra.mxu0 %v412
        %434 = vmatprep.subr.mxu0 0.0
        %435 = vmatpush1.msra.mxu0 0.0
        %436 = vmatprep.subr.mxu0 0.0
        %437 = vmatpush1.msra.mxu0 0.0
        %438 = vmatprep.subr.mxu0 0.0
        %439 = vmatpush1.msra.mxu0 0.0
        %440 = vmatprep.subr.mxu0 0.0
        %441 = vmatpush1.msra.mxu0 0.0
        %442 = vmatprep.subr.mxu0 0.0
        %443 = vmatpush1.msra.mxu0 0.0
        %444 = vmatprep.subr.mxu0 0.0
        %445 = vmatpush1.msra.mxu0 0.0
        %446 = vmatprep.subr.mxu0 0.0
        %447 = vmatpush1.msra.mxu0 0.0
        %448 = vmatprep.subr.mxu0 0.0
        %449 = vmatpush1.msra.mxu0 0.0
        %450 = vmatprep.subr.mxu0 0.0
        %451 = vmatpush1.msra.mxu0 0.0
        %452 = vmatprep.subr.mxu0 0.0
        %453 = vmatpush1.msra.mxu0 0.0
        %454 = vmatprep.subr.mxu0 0.0
        %455 = vmatpush1.msra.mxu0 0.0
        %456 = vmatprep.subr.mxu0 0.0
        %457 = vmatpush1.msra.mxu0 0.0
        %458 = vmatprep.subr.mxu0 0.0
        %459 = vmatpush1.msra.mxu0 0.0
        %460 = vmatprep.subr.mxu0 0.0
        %461 = vmatpush1.msra.mxu0 0.0
        %462 = vmatprep.subr.mxu0 0.0
        %463 = vmatpush1.msra.mxu0 0.0
        %464 = vmatprep.subr.mxu0 0.0
        %465 = vmatpush1.msra.mxu0 0.0
        %466 = vmatprep.subr.mxu0 0.0
        %467 = vmatpush1.msra.mxu0 0.0
        %468 = vmatprep.subr.mxu0 0.0
        %469 = vmatpush1.msra.mxu0 0.0
        %470 = vmatprep.subr.mxu0 0.0
        %471 = vmatpush1.msra.mxu0 0.0
        %472 = vmatprep.subr.mxu0 0.0
        %473 = vmatpush1.msra.mxu0 0.0
        %474 = vmatprep.subr.mxu0 0.0
        %475 = vmatpush1.msra.mxu0 0.0
        %476 = vmatprep.subr.mxu0 0.0
        %477 = vmatpush1.msra.mxu0 0.0
        %478 = vmatprep.subr.mxu0 0.0
        %479 = vmatpush1.msra.mxu0 0.0
        %480 = vmatprep.subr.mxu0 0.0
        %481 = vmatpush1.msra.mxu0 0.0
        %482 = vmatprep.subr.mxu0 0.0
        %483 = vmatpush1.msra.mxu0 0.0
        %484 = vmatprep.subr.mxu0 0.0
        %485 = vmatpush1.msra.mxu0 0.0
        %486 = vmatprep.subr.mxu0 0.0
        %487 = vmatpush1.msra.mxu0 0.0
        %488 = vmatprep.subr.mxu0 0.0
        %489 = vmatpush1.msra.mxu0 0.0
        %490 = vmatprep.mubr.f32.mxu0 0.0
        %491 = vmatmul.mubr.f32.gmra.mrb[0].mxu0 %v415
        %v492 = vpop.f32.mrb[0].mxu0
        %v493 = vadd.f32 0.0, %v492
        %v494 = vpop.f32.mrb[0].mxu0
        %495 = vmatprep.mubr.f32.mxu0 0.0
        %496 = vmatmul.mubr.f32.gmra.mrb[0].mxu0 %v418
        %v497 = vpop.f32.mrb[0].mxu0
        %v498 = vadd.f32 0.0, %v497
        %v499 = vpop.f32.mrb[0].mxu0
        %500 = vmatprep.mubr.f32.mxu0 0.0
        %501 = vmatmul.mubr.f32.gmra.mrb[0].mxu0 %v421
        %v502 = vpop.f32.mrb[0].mxu0
        %v503 = vadd.f32 0.0, %v502
        %v504 = vpop.f32.mrb[0].mxu0
        %505 = vmatprep.mubr.f32.mxu0 0.0
        %506 = vmatmul.mubr.f32.gmra.mrb[0].mxu0 %v424
        %v507 = vpop.f32.mrb[0].mxu0
        %v508 = vadd.f32 0.0, %v507
        %v509 = vpop.f32.mrb[0].mxu0
        %510 = vdwg.mxu0
        %v511 = vld [vmem:[#allocation7] sm:$0xff]
        %v512 = vld [vmem:[#allocation7 + $0x8] sm:$0xff]
        %v513 = vld [vmem:[#allocation7 + $0x10] sm:$0xff]
        %v514 = vld [vmem:[#allocation7 + $0x18] sm:$0xff]
        %515 = vmatprep.subr.mxu0 0.0
        %516 = vmatpush1.msra.mxu0 %v511
        %517 = vmatprep.subr.mxu0 0.0
        %518 = vmatpush1.msra.mxu0 %v512
        %519 = vmatprep.subr.mxu0 0.0
        %520 = vmatpush1.msra.mxu0 %v513
        %521 = vmatprep.subr.mxu0 0.0
        %522 = vmatpush1.msra.mxu0 %v514
        %523 = vmatprep.subr.mxu0 0.0
        %524 = vmatpush1.msra.mxu0 0.0
        %525 = vmatprep.subr.mxu0 0.0
        %526 = vmatpush1.msra.mxu0 0.0
        %527 = vmatprep.subr.mxu0 0.0
        %528 = vmatpush1.msra.mxu0 0.0
        %529 = vmatprep.subr.mxu0 0.0
        %530 = vmatpush1.msra.mxu0 0.0
        %531 = vmatprep.subr.mxu0 0.0
        %532 = vmatpush1.msra.mxu0 0.0
        %533 = vmatprep.subr.mxu0 0.0
        %534 = vmatpush1.msra.mxu0 0.0
        %535 = vmatprep.subr.mxu0 0.0
        %536 = vmatpush1.msra.mxu0 0.0
        %537 = vmatprep.subr.mxu0 0.0
        %538 = vmatpush1.msra.mxu0 0.0
        %539 = vmatprep.subr.mxu0 0.0
        %540 = vmatpush1.msra.mxu0 0.0
        %541 = vmatprep.subr.mxu0 0.0
        %542 = vmatpush1.msra.mxu0 0.0
        %543 = vmatprep.subr.mxu0 0.0
        %544 = vmatpush1.msra.mxu0 0.0
        %545 = vmatprep.subr.mxu0 0.0
        %546 = vmatpush1.msra.mxu0 0.0
        %547 = vmatprep.subr.mxu0 0.0
        %548 = vmatpush1.msra.mxu0 0.0
        %549 = vmatprep.subr.mxu0 0.0
        %550 = vmatpush1.msra.mxu0 0.0
        %551 = vmatprep.subr.mxu0 0.0
        %552 = vmatpush1.msra.mxu0 0.0
        %553 = vmatprep.subr.mxu0 0.0
        %554 = vmatpush1.msra.mxu0 0.0
        %555 = vmatprep.subr.mxu0 0.0
        %556 = vmatpush1.msra.mxu0 0.0
        %557 = vmatprep.subr.mxu0 0.0
        %558 = vmatpush1.msra.mxu0 0.0
        %559 = vmatprep.subr.mxu0 0.0
        %560 = vmatpush1.msra.mxu0 0.0
        %561 = vmatprep.subr.mxu0 0.0
        %562 = vmatpush1.msra.mxu0 0.0
        %563 = vmatprep.subr.mxu0 0.0
        %564 = vmatpush1.msra.mxu0 0.0
        %565 = vmatprep.subr.mxu0 0.0
        %566 = vmatpush1.msra.mxu0 0.0
        %567 = vmatprep.subr.mxu0 0.0
        %568 = vmatpush1.msra.mxu0 0.0
        %569 = vmatprep.subr.mxu0 0.0
        %570 = vmatpush1.msra.mxu0 0.0
        %571 = vmatprep.subr.mxu0 0.0
        %572 = vmatpush1.msra.mxu0 0.0
        %573 = vmatprep.subr.mxu0 0.0
        %574 = vmatpush1.msra.mxu0 0.0
        %575 = vmatprep.subr.mxu0 0.0
        %576 = vmatpush1.msra.mxu0 0.0
        %577 = vmatprep.subr.mxu0 0.0
        %578 = vmatpush1.msra.mxu0 0.0
        %579 = vmatprep.mubr.f32.mxu0 0.0
        %580 = vmatmul.mubr.f32.gmra.mrb[0].mxu0 %v415
        %v581 = vpop.f32.mrb[0].mxu0
        %v582 = vadd.f32 0.0, %v581
        %v583 = vpop.f32.mrb[0].mxu0
        %584 = vmatprep.mubr.f32.mxu0 0.0
        %585 = vmatmul.mubr.f32.gmra.mrb[0].mxu0 %v418
        %v586 = vpop.f32.mrb[0].mxu0
        %v587 = vadd.f32 0.0, %v586
        %v588 = vpop.f32.mrb[0].mxu0
        %589 = vmatprep.mubr.f32.mxu0 0.0
        %590 = vmatmul.mubr.f32.gmra.mrb[0].mxu0 %v421
        %v591 = vpop.f32.mrb[0].mxu0
        %v592 = vadd.f32 0.0, %v591
        %v593 = vpop.f32.mrb[0].mxu0
        %594 = vmatprep.mubr.f32.mxu0 0.0
        %595 = vmatmul.mubr.f32.gmra.mrb[0].mxu0 %v424
        %v596 = vpop.f32.mrb[0].mxu0
        %v597 = vadd.f32 0.0, %v596
        %v598 = vpop.f32.mrb[0].mxu0
        %599 = vdwg.mxu0
        %v600 = vld [vmem:[#allocation8] sm:$0xff]
        %v601 = vld [vmem:[#allocation8 + $0x8] sm:$0xff]
        %v602 = vld [vmem:[#allocation8 + $0x10] sm:$0xff]
        %v603 = vld [vmem:[#allocation8 + $0x18] sm:$0xff]
        %v605 = vsel %vm413, %v600, 0
        %v608 = vsel %vm413, %v601, 0
        %v611 = vsel %vm413, %v602, 0
        %v614 = vsel %vm413, %v603, 0
        %616 = vmatprep.subr.mxu0 0.0
        %617 = vmatpush1.msra.mxu0 %v493
        %618 = vmatprep.subr.mxu0 0.0
        %619 = vmatpush1.msra.mxu0 %v498
        %620 = vmatprep.subr.mxu0 0.0
        %621 = vmatpush1.msra.mxu0 %v503
        %622 = vmatprep.subr.mxu0 0.0
        %623 = vmatpush1.msra.mxu0 %v508
        %624 = vmatprep.subr.mxu0 0.0
        %625 = vmatpush1.msra.mxu0 0.0
        %626 = vmatprep.subr.mxu0 0.0
        %627 = vmatpush1.msra.mxu0 0.0
        %628 = vmatprep.subr.mxu0 0.0
        %629 = vmatpush1.msra.mxu0 0.0
        %630 = vmatprep.subr.mxu0 0.0
        %631 = vmatpush1.msra.mxu0 0.0
        %632 = vmatprep.subr.mxu0 0.0
        %633 = vmatpush1.msra.mxu0 0.0
        %634 = vmatprep.subr.mxu0 0.0
        %635 = vmatpush1.msra.mxu0 0.0
        %636 = vmatprep.subr.mxu0 0.0
        %637 = vmatpush1.msra.mxu0 0.0
        %638 = vmatprep.subr.mxu0 0.0
        %639 = vmatpush1.msra.mxu0 0.0
        %640 = vmatprep.subr.mxu0 0.0
        %641 = vmatpush1.msra.mxu0 0.0
        %642 = vmatprep.subr.mxu0 0.0
        %643 = vmatpush1.msra.mxu0 0.0
        %644 = vmatprep.subr.mxu0 0.0
        %645 = vmatpush1.msra.mxu0 0.0
        %646 = vmatprep.subr.mxu0 0.0
        %647 = vmatpush1.msra.mxu0 0.0
        %648 = vmatprep.subr.mxu0 0.0
        %649 = vmatpush1.msra.mxu0 0.0
        %650 = vmatprep.subr.mxu0 0.0
        %651 = vmatpush1.msra.mxu0 0.0
        %652 = vmatprep.subr.mxu0 0.0
        %653 = vmatpush1.msra.mxu0 0.0
        %654 = vmatprep.subr.mxu0 0.0
        %655 = vmatpush1.msra.mxu0 0.0
        %656 = vmatprep.subr.mxu0 0.0
        %657 = vmatpush1.msra.mxu0 0.0
        %658 = vmatprep.subr.mxu0 0.0
        %659 = vmatpush1.msra.mxu0 0.0
        %660 = vmatprep.subr.mxu0 0.0
        %661 = vmatpush1.msra.mxu0 0.0
        %662 = vmatprep.subr.mxu0 0.0
        %663 = vmatpush1.msra.mxu0 0.0
        %664 = vmatprep.subr.mxu0 0.0
        %665 = vmatpush1.msra.mxu0 0.0
        %666 = vmatprep.subr.mxu0 0.0
        %667 = vmatpush1.msra.mxu0 0.0
        %668 = vmatprep.subr.mxu0 0.0
        %669 = vmatpush1.msra.mxu0 0.0
        %670 = vmatprep.subr.mxu0 0.0
        %671 = vmatpush1.msra.mxu0 0.0
        %672 = vmatprep.subr.mxu0 0.0
        %673 = vmatpush1.msra.mxu0 0.0
        %674 = vmatprep.subr.mxu0 0.0
        %675 = vmatpush1.msra.mxu0 0.0
        %676 = vmatprep.subr.mxu0 0.0
        %677 = vmatpush1.msra.mxu0 0.0
        %678 = vmatprep.subr.mxu0 0.0
        %679 = vmatpush1.msra.mxu0 0.0
        %680 = vmatprep.mubr.f32.mxu0 0.0
        %681 = vmatmul.mubr.f32.gmra.mrb[0].mxu0 %v605
        %v682 = vpop.f32.mrb[0].mxu0
        %v683 = vadd.f32 0.0, %v682
        %v684 = vpop.f32.mrb[0].mxu0
        %685 = vmatprep.mubr.f32.mxu0 0.0
        %686 = vmatmul.mubr.f32.gmra.mrb[0].mxu0 %v608
        %v687 = vpop.f32.mrb[0].mxu0
        %v688 = vadd.f32 0.0, %v687
        %v689 = vpop.f32.mrb[0].mxu0
        %690 = vmatprep.mubr.f32.mxu0 0.0
        %691 = vmatmul.mubr.f32.gmra.mrb[0].mxu0 %v611
        %v692 = vpop.f32.mrb[0].mxu0
        %v693 = vadd.f32 0.0, %v692
        %v694 = vpop.f32.mrb[0].mxu0
        %695 = vmatprep.mubr.f32.mxu0 0.0
        %696 = vmatmul.mubr.f32.gmra.mrb[0].mxu0 %v614
        %v697 = vpop.f32.mrb[0].mxu0
        %v698 = vadd.f32 0.0, %v697
        %v699 = vpop.f32.mrb[0].mxu0
        %700 = vdwg.mxu0
        %v701 = vld [vmem:[#allocation10] sm:$0xff]
        %v702 = vld [vmem:[#allocation10 + $0x8] sm:$0xff]
        %v703 = vld [vmem:[#allocation10 + $0x10] sm:$0xff]
        %v704 = vld [vmem:[#allocation10 + $0x18] sm:$0xff]
        %v706 = vsel %vm413, %v701, 0
        %v709 = vsel %vm413, %v702, 0
        %v712 = vsel %vm413, %v703, 0
        %v715 = vsel %vm413, %v704, 0
        %717 = vmatprep.subr.mxu0 0.0
        %718 = vmatpush1.msra.mxu0 %v582
        %719 = vmatprep.subr.mxu0 0.0
        %720 = vmatpush1.msra.mxu0 %v587
        %721 = vmatprep.subr.mxu0 0.0
        %722 = vmatpush1.msra.mxu0 %v592
        %723 = vmatprep.subr.mxu0 0.0
        %724 = vmatpush1.msra.mxu0 %v597
        %725 = vmatprep.subr.mxu0 0.0
        %726 = vmatpush1.msra.mxu0 0.0
        %727 = vmatprep.subr.mxu0 0.0
        %728 = vmatpush1.msra.mxu0 0.0
        %729 = vmatprep.subr.mxu0 0.0
        %730 = vmatpush1.msra.mxu0 0.0
        %731 = vmatprep.subr.mxu0 0.0
        %732 = vmatpush1.msra.mxu0 0.0
        %733 = vmatprep.subr.mxu0 0.0
        %734 = vmatpush1.msra.mxu0 0.0
        %735 = vmatprep.subr.mxu0 0.0
        %736 = vmatpush1.msra.mxu0 0.0
        %737 = vmatprep.subr.mxu0 0.0
        %738 = vmatpush1.msra.mxu0 0.0
        %739 = vmatprep.subr.mxu0 0.0
        %740 = vmatpush1.msra.mxu0 0.0
        %741 = vmatprep.subr.mxu0 0.0
        %742 = vmatpush1.msra.mxu0 0.0
        %743 = vmatprep.subr.mxu0 0.0
        %744 = vmatpush1.msra.mxu0 0.0
        %745 = vmatprep.subr.mxu0 0.0
        %746 = vmatpush1.msra.mxu0 0.0
        %747 = vmatprep.subr.mxu0 0.0
        %748 = vmatpush1.msra.mxu0 0.0
        %749 = vmatprep.subr.mxu0 0.0
        %750 = vmatpush1.msra.mxu0 0.0
        %751 = vmatprep.subr.mxu0 0.0
        %752 = vmatpush1.msra.mxu0 0.0
        %753 = vmatprep.subr.mxu0 0.0
        %754 = vmatpush1.msra.mxu0 0.0
        %755 = vmatprep.subr.mxu0 0.0
        %756 = vmatpush1.msra.mxu0 0.0
        %757 = vmatprep.subr.mxu0 0.0
        %758 = vmatpush1.msra.mxu0 0.0
        %759 = vmatprep.subr.mxu0 0.0
        %760 = vmatpush1.msra.mxu0 0.0
        %761 = vmatprep.subr.mxu0 0.0
        %762 = vmatpush1.msra.mxu0 0.0
        %763 = vmatprep.subr.mxu0 0.0
        %764 = vmatpush1.msra.mxu0 0.0
        %765 = vmatprep.subr.mxu0 0.0
        %766 = vmatpush1.msra.mxu0 0.0
        %767 = vmatprep.subr.mxu0 0.0
        %768 = vmatpush1.msra.mxu0 0.0
        %769 = vmatprep.subr.mxu0 0.0
        %770 = vmatpush1.msra.mxu0 0.0
        %771 = vmatprep.subr.mxu0 0.0
        %772 = vmatpush1.msra.mxu0 0.0
        %773 = vmatprep.subr.mxu0 0.0
        %774 = vmatpush1.msra.mxu0 0.0
        %775 = vmatprep.subr.mxu0 0.0
        %776 = vmatpush1.msra.mxu0 0.0
        %777 = vmatprep.subr.mxu0 0.0
        %778 = vmatpush1.msra.mxu0 0.0
        %779 = vmatprep.subr.mxu0 0.0
        %780 = vmatpush1.msra.mxu0 0.0
        %781 = vmatprep.mubr.f32.mxu0 0.0
        %782 = vmatmul.mubr.f32.gmra.mrb[0].mxu0 %v706
        %v783 = vpop.f32.mrb[0].mxu0
        %v784 = vadd.f32 0.0, %v783
        %v785 = vpop.f32.mrb[0].mxu0
        %786 = vmatprep.mubr.f32.mxu0 0.0
        %787 = vmatmul.mubr.f32.gmra.mrb[0].mxu0 %v709
        %v788 = vpop.f32.mrb[0].mxu0
        %v789 = vadd.f32 0.0, %v788
        %v790 = vpop.f32.mrb[0].mxu0
        %791 = vmatprep.mubr.f32.mxu0 0.0
        %792 = vmatmul.mubr.f32.gmra.mrb[0].mxu0 %v712
        %v793 = vpop.f32.mrb[0].mxu0
        %v794 = vadd.f32 0.0, %v793
        %v795 = vpop.f32.mrb[0].mxu0
        %796 = vmatprep.mubr.f32.mxu0 0.0
        %797 = vmatmul.mubr.f32.gmra.mrb[0].mxu0 %v715
        %v798 = vpop.f32.mrb[0].mxu0
        %v799 = vadd.f32 0.0, %v798
        %v800 = vpop.f32.mrb[0].mxu0
        %801 = vdwg.mxu0
        %v802 = vld [vmem:[#allocation11] sm:$0x1]
        %v803 = vld [vmem:[#allocation11 + $0x1] sm:$0x1]
        %v804 = vld [vmem:[#allocation11 + $0x2] sm:$0x1]
        %v805 = vld [vmem:[#allocation11 + $0x3] sm:$0x1]
        %v806 = vld [vmem:[#allocation11 + $0x4] sm:$0x1]
        %v807 = vld [vmem:[#allocation11 + $0x5] sm:$0x1]
        %v808 = vld [vmem:[#allocation11 + $0x6] sm:$0x1]
        %v809 = vld [vmem:[#allocation11 + $0x7] sm:$0x1]
        %v810 = vld [vmem:[#allocation13] sm:$0x1]
        %v811 = vld [vmem:[#allocation13 + $0x1] sm:$0x1]
        %v812 = vld [vmem:[#allocation13 + $0x2] sm:$0x1]
        %v813 = vld [vmem:[#allocation13 + $0x3] sm:$0x1]
        %v814 = vld [vmem:[#allocation13 + $0x4] sm:$0x1]
        %v815 = vld [vmem:[#allocation13 + $0x5] sm:$0x1]
        %v816 = vld [vmem:[#allocation13 + $0x6] sm:$0x1]
        %v817 = vld [vmem:[#allocation13 + $0x7] sm:$0x1]
        %v822 = vlaneseq
        %v823 = vshrl.u32 %v822, 7
        %v824 = vsub.s32 0, %v823
        %v825 = vrot.slane %v802, %v824
        %v826 = vlaneseq
        %v827 = vshrl.u32 %v826, 7
        %v828 = vsub.s32 0, %v827
        %v829 = vrot.slane %v803, %v828
        %v830 = vlaneseq
        %v831 = vshrl.u32 %v830, 7
        %v832 = vsub.s32 0, %v831
        %v833 = vrot.slane %v804, %v832
        %v834 = vlaneseq
        %v835 = vshrl.u32 %v834, 7
        %v836 = vsub.s32 0, %v835
        %v837 = vrot.slane %v805, %v836
        %838 = vset.pattern.permute.xlu0 0
        %839 = vperm.xlu0 %838, %v825
        %v840 = vpop.permute.xlu0 %839
        %842 = vset.pattern.permute.xlu0 0
        %843 = vperm.xlu0 %842, %v829
        %v844 = vpop.permute.xlu0 %843
        %846 = vset.pattern.permute.xlu0 0
        %847 = vperm.xlu0 %846, %v833
        %v848 = vpop.permute.xlu0 %847
        %850 = vset.pattern.permute.xlu0 0
        %851 = vperm.xlu0 %850, %v837
        %v852 = vpop.permute.xlu0 %851
        %v854 = vmul.f32 %v683, %v840
        %v855 = vmul.f32 %v688, %v844
        %v856 = vmul.f32 %v693, %v848
        %v857 = vmul.f32 %v698, %v852
        %v862 = vlaneseq
        %v863 = vshrl.u32 %v862, 7
        %v864 = vsub.s32 0, %v863
        %v865 = vrot.slane %v810, %v864
        %v866 = vlaneseq
        %v867 = vshrl.u32 %v866, 7
        %v868 = vsub.s32 0, %v867
        %v869 = vrot.slane %v811, %v868
        %v870 = vlaneseq
        %v871 = vshrl.u32 %v870, 7
        %v872 = vsub.s32 0, %v871
        %v873 = vrot.slane %v812, %v872
        %v874 = vlaneseq
        %v875 = vshrl.u32 %v874, 7
        %v876 = vsub.s32 0, %v875
        %v877 = vrot.slane %v813, %v876
        %878 = vset.pattern.permute.xlu0 0
        %879 = vperm.xlu0 %878, %v865
        %v880 = vpop.permute.xlu0 %879
        %882 = vset.pattern.permute.xlu0 0
        %883 = vperm.xlu0 %882, %v869
        %v884 = vpop.permute.xlu0 %883
        %886 = vset.pattern.permute.xlu0 0
        %887 = vperm.xlu0 %886, %v873
        %v888 = vpop.permute.xlu0 %887
        %890 = vset.pattern.permute.xlu0 0
        %891 = vperm.xlu0 %890, %v877
        %v892 = vpop.permute.xlu0 %891
        %v894 = vadd.f32 %v854, %v880
        %v895 = vadd.f32 %v855, %v884
        %v896 = vadd.f32 %v856, %v888
        %v897 = vadd.f32 %v857, %v892
        %vm898 = vcmask 64512
        %899 = vst.msk [vmem:[%s400] sm:$0xff] %vm898, %v894
        %900 = vst.msk [vmem:[%s400 + $0x8] sm:$0xff] %vm898, %v895
        %901 = vst.msk [vmem:[%s400 + $0x10] sm:$0xff] %vm898, %v896
        %902 = vst.msk [vmem:[%s400 + $0x18] sm:$0xff] %vm898, %v897
        %v907 = vlaneseq
        %v908 = vshrl.u32 %v907, 7
        %v909 = vsub.s32 0, %v908
        %v910 = vrot.slane %v806, %v909
        %v911 = vlaneseq
        %v912 = vshrl.u32 %v911, 7
        %v913 = vsub.s32 0, %v912
        %v914 = vrot.slane %v807, %v913
        %v915 = vlaneseq
        %v916 = vshrl.u32 %v915, 7
        %v917 = vsub.s32 0, %v916
        %v918 = vrot.slane %v808, %v917
        %v919 = vlaneseq
        %v920 = vshrl.u32 %v919, 7
        %v921 = vsub.s32 0, %v920
        %v922 = vrot.slane %v809, %v921
        %923 = vset.pattern.permute.xlu0 0
        %924 = vperm.xlu0 %923, %v910
        %v925 = vpop.permute.xlu0 %924
        %927 = vset.pattern.permute.xlu0 0
        %928 = vperm.xlu0 %927, %v914
        %v929 = vpop.permute.xlu0 %928
        %931 = vset.pattern.permute.xlu0 0
        %932 = vperm.xlu0 %931, %v918
        %v933 = vpop.permute.xlu0 %932
        %935 = vset.pattern.permute.xlu0 0
        %936 = vperm.xlu0 %935, %v922
        %v937 = vpop.permute.xlu0 %936
        %v939 = vmul.f32 %v784, %v925
        %v940 = vmul.f32 %v789, %v929
        %v941 = vmul.f32 %v794, %v933
        %v942 = vmul.f32 %v799, %v937
        %v947 = vlaneseq
        %v948 = vshrl.u32 %v947, 7
        %v949 = vsub.s32 0, %v948
        %v950 = vrot.slane %v814, %v949
        %v951 = vlaneseq
        %v952 = vshrl.u32 %v951, 7
        %v953 = vsub.s32 0, %v952
        %v954 = vrot.slane %v815, %v953
        %v955 = vlaneseq
        %v956 = vshrl.u32 %v955, 7
        %v957 = vsub.s32 0, %v956
        %v958 = vrot.slane %v816, %v957
        %v959 = vlaneseq
        %v960 = vshrl.u32 %v959, 7
        %v961 = vsub.s32 0, %v960
        %v962 = vrot.slane %v817, %v961
        %963 = vset.pattern.permute.xlu0 0
        %964 = vperm.xlu0 %963, %v950
        %v965 = vpop.permute.xlu0 %964
        %967 = vset.pattern.permute.xlu0 0
        %968 = vperm.xlu0 %967, %v954
        %v969 = vpop.permute.xlu0 %968
        %971 = vset.pattern.permute.xlu0 0
        %972 = vperm.xlu0 %971, %v958
        %v973 = vpop.permute.xlu0 %972
        %975 = vset.pattern.permute.xlu0 0
        %976 = vperm.xlu0 %975, %v962
        %v977 = vpop.permute.xlu0 %976
        %v979 = vadd.f32 %v939, %v965
        %v980 = vadd.f32 %v940, %v969
        %v981 = vadd.f32 %v941, %v973
        %v982 = vadd.f32 %v942, %v977
        %s983 = scalar_lea.vmem %s400, 32 [#allocation14]
        %984 = vst.msk [vmem:[%s983] sm:$0xff] %vm898, %v979
        %985 = vst.msk [vmem:[%s983 + $0x8] sm:$0xff] %vm898, %v980
        %986 = vst.msk [vmem:[%s983 + $0x10] sm:$0xff] %vm898, %v981
        %987 = vst.msk [vmem:[%s983 + $0x18] sm:$0xff] %vm898, %v982
        %s988 = sand.u32 %s203, 1
        %s989 = scalar_lea.sflag [#allocation4], %s988
        %s990 = sand.u32 %s203, 1
        %s991 = smul.addr %s990, 64
        %s992 = scalar_lea.vmem [#allocation14], %s991
        // Predicated region
        $region77: #{tpu_custom_call.1} parent=47 // pred_check
          %p993 = pneg %p213
        $region78: #{tpu_custom_call.1} parent=47 // pred_check_branch
          %995 = sbr.rel (%p993) target = $region80
        $region79: #{tpu_custom_call.1} parent=47 // pred_region
          %s997 = ssub.s32 1024, 1024
          %998 = vsyncadd %s989, %s997
          %s999 = smul.addr %s31, 8
          %s1000 = sadd.s32 %s32, %s999
          %s1001 = smul.addr %s1000, 128
          %s1002 = scalar_lea.hbm %s7, %s1001
          %s1003 = sshll.u32 %s992, 4
          %s1004 = int_to_ptr.vmem [resolvable:$true] %s1003
          %1009 = dma.vmem_to_hbm [thread:$0]  %s1004, 1024, %s1002, %s989, 128, 128, 8
        $region80: #{tpu_custom_call.1} parent=47 // pred_fallthru
          _
      $region48: #{tpu_custom_call.1} parent=5 // pred_fallthru
        _
      %p1010 = scmp.le.s32.totalorder 2, %s22
      // Predicated region
      $region81: #{tpu_custom_call.1} parent=5 // pred_check
        %p1011 = pneg %p1010
      $region82: #{tpu_custom_call.1} parent=5 // pred_check_branch
        %1013 = sbr.rel (%p1011) target = $region84
      $region83: #{tpu_custom_call.1} parent=5 // pred_region
        %s1014 = ssub.s32 %s22, 2
        // Predicated region
        $region85: #{tpu_custom_call.1} parent=83 // pred_check
          %p1015 = pneg %p219
        $region86: #{tpu_custom_call.1} parent=83 // pred_check_branch
          %1017 = sbr.rel (%p1015) target = $region88
        $region87: #{tpu_custom_call.1} parent=83 // pred_region
          %s1018 = sand.u32 %s204, 1
          %s1019 = scalar_lea.sflag [#allocation4], %s1018
          %s1020 = sand.u32 %s204, 1
          %s1021 = smul.addr %s1020, 64
          %s1022 = scalar_lea.vmem [#allocation14], %s1021
          %1023 = dma.done %s1019, 1024
        $region88: #{tpu_custom_call.1} parent=83 // pred_fallthru
          _
      $region84: #{tpu_custom_call.1} parent=5 // pred_fallthru
        _
    $region6: #{tpu_custom_call.1} parent=1 // loop_footer
      %s26 = sadd.s32 1, %s22
    $region7: #{tpu_custom_call.1} parent=1 // loop_footer_branch
      %21 = sbr.rel target = $region3
    $region8: #{tpu_custom_call.1} parent=1 // loop_exit
      _
    %1024 = vsyncpa [#allocation3], 1
    %s1025 = scalar_lea.sflag [#allocation3], 1
    %1026 = vsyncpa %s1025, 1
    %1027 = vsyncpa [#allocation6], 1
    %1028 = vsyncpa [#allocation9], 1
    %1029 = vsyncpa [#allocation12], 1
    %1030 = vsyncpa [#allocation4], 1
    %s1031 = scalar_lea.sflag [#allocation4], 1
    %1032 = vsyncpa %s1031, 1

</llo_original>
